<compile_context>
chip_gen: v7x
topology: tpu7x:2x2x1
jax: 0.10.0
libtpu: 0.0.40
codegen_flags: <defaults>
</compile_context>

<pallas_src>
import functools

import jax
import jax.numpy as jnp
from jax.experimental import pallas as pl
from jax.experimental.pallas import tpu as pltpu


def _round_up(x, m):
    return (x + m - 1) // m * m


def _ccc_kernel(minlen_ref, lens_ref, y_pred_ref, y_true_ref, ccc_ref, acc_ref,
                *, lane_w):
    i = pl.program_id(0)           # batch tile  ("parallel")
    k = pl.program_id(1)           # time tile   ("arbitrary" reduction axis)
    nk = pl.num_programs(1)

    # -- init the lane-partial accumulators at the first T tile --------------
    @pl.when(k == 0)
    def _init():
        acc_ref[...] = jnp.zeros_like(acc_ref)

    yp = y_pred_ref[...].astype(jnp.float32)           # (b_tile, t_tile)
    yt = y_true_ref[...].astype(jnp.float32)           # (b_tile, t_tile)
    b_tile, t_tile = yp.shape

    if lane_w == 1:
        # Small / unaligned T tile: plain cross-lane reduce per step.
        def lane_sum(x):
            return jnp.sum(x, axis=1, keepdims=True)
    else:
        # Lane-partial sum: pairwise tree over lane-aligned 128-wide chunks
        # (pure VPU adds; the single XLU reduce is deferred to finalize).
        def lane_sum(x):
            chunks = [x[:, j * lane_w:(j + 1) * lane_w]
                      for j in range(t_tile // lane_w)]
            while len(chunks) > 1:
                nxt = [chunks[a] + chunks[a + 1]
                       for a in range(0, len(chunks) - 1, 2)]
                if len(chunks) % 2:
                    nxt.append(chunks[-1])
                chunks = nxt
            return chunks[0]

    def accumulate(a, b, n_part):
        # Six per-row sufficient statistics: n, sum(yt), sum(yp), sum(yt^2),
        # sum(yp^2), sum(yt*yp) -- all kept as (b_tile, lane_w) lane-partials.
        acc_ref[0] += n_part
        acc_ref[1] += lane_sum(a)
        acc_ref[2] += lane_sum(b)
        acc_ref[3] += lane_sum(a * a)
        acc_ref[4] += lane_sum(b * b)
        acc_ref[5] += lane_sum(a * b)

    # Mask-free fast path when every row of this batch tile is fully valid
    # over this time tile (the common case; also skips ragged-tail handling).
    tile_end = (k + 1) * t_tile
    full = minlen_ref[i] >= tile_end

    @pl.when(full)
    def _fast():
        accumulate(yt, yp, jnp.float32(t_tile // lane_w))

    @pl.when(jnp.logical_not(full))
    def _masked():
        col = jax.lax.broadcasted_iota(jnp.int32, (b_tile, t_tile), 1) \
            + k * t_tile
        valid = col < lens_ref[...]                    # (b_tile, t_tile)
        # select, not multiply: out-of-bounds tail data may be garbage / NaN.
        ytm = jnp.where(valid, yt, 0.0)
        ypm = jnp.where(valid, yp, 0.0)
        accumulate(ytm, ypm, lane_sum(valid.astype(jnp.float32)))

    # -- finalize: single cross-lane reduce + per-row CCC on the last tile ---
    @pl.when(k == nk - 1)
    def _finalize():
        n = jnp.sum(acc_ref[0], axis=1, keepdims=True)
        syt = jnp.sum(acc_ref[1], axis=1, keepdims=True)
        syp = jnp.sum(acc_ref[2], axis=1, keepdims=True)
        sytt = jnp.sum(acc_ref[3], axis=1, keepdims=True)
        sypp = jnp.sum(acc_ref[4], axis=1, keepdims=True)
        sytp = jnp.sum(acc_ref[5], axis=1, keepdims=True)
        inv_n = 1.0 / n
        yt_mean = syt * inv_n
        yp_mean = syp * inv_n
        yt_var = sytt * inv_n - yt_mean * yt_mean
        yp_var = sypp * inv_n - yp_mean * yp_mean
        cov = sytp * inv_n - yt_mean * yp_mean
        dmean = yt_mean - yp_mean
        ccc_ref[...] = 2.0 * cov / (yt_var + yp_var + dmean * dmean)


def _choose_tiles(B, T, itemsize, max_t_tile, target_block_bytes):
    """Pick (b_tile, t_tile).

    Block dims are always either multiples of (8, 128) (16 sublanes for
    2-byte dtypes) or exactly equal to the array dims, so ragged cdiv grids
    stay legal; the per-step input block targets ~target_block_bytes per
    input; the batch axis is split into >= 2 tiles when B allows (v7x
    megacore)."""
    sub = 16 if itemsize <= 2 else 8
    b_cap = 128
    if B <= b_cap:
        b_tile = B                                     # equal-to-array is legal
        if B >= 2 * sub:                               # split for 2 TensorCores
            b_tile = _round_up(pl.cdiv(B, 2), sub)
    else:
        b_tile = b_cap
    t_des = target_block_bytes // max(1, b_tile * itemsize)
    t_des = max(128, min((t_des // 128) * 128, max_t_tile))
    t_tile = T if T <= t_des else t_des                # equal-to-array is legal
    return b_tile, t_tile


def _ccc_loss_pallas(y_pred, y_true, seq_lens=None, *, max_t_tile=8192,
                     target_block_bytes=1 << 20):
    """Streaming Pallas CCC loss. Returns a scalar float32."""
    y_pred = jnp.asarray(y_pred)
    y_true = jnp.asarray(y_true)
    assert y_pred.shape == y_true.shape and y_pred.ndim == 2
    B, T = y_true.shape
    itemsize = max(y_pred.dtype.itemsize, y_true.dtype.itemsize)

    if seq_lens is None:
        lens = jnp.full((B,), T, dtype=jnp.int32)
    else:
        # Clamp: lengths beyond T must not admit garbage columns.
        lens = jnp.minimum(jnp.asarray(seq_lens, jnp.int32).reshape(B), T)

    b_tile, t_tile = _choose_tiles(B, T, itemsize, max_t_tile,
                                   target_block_bytes)
    lane_w = 128 if t_tile % 128 == 0 else 1

    nb = pl.cdiv(B, b_tile)
    nk = pl.cdiv(T, t_tile)

    # Per-batch-tile minimum sequence length (tiny, SMEM scalar prefetch).
    # Rows padded for the min-reduction get T so they never force the mask.
    pad = nb * b_tile - B
    lens_src = jnp.pad(lens, (0, pad), constant_values=T) if pad else lens
    tile_min_len = jnp.min(lens_src.reshape(nb, b_tile), axis=1).astype(
        jnp.int32)

    lens2d = lens.reshape(B, 1)

    bytes_accessed = (y_pred.dtype.itemsize + y_true.dtype.itemsize) * B * T
    cost = pl.CostEstimate(flops=12 * B * T, transcendentals=0,
                           bytes_accessed=bytes_accessed)

    kernel = functools.partial(_ccc_kernel, lane_w=lane_w)

    grid_spec = pltpu.PrefetchScalarGridSpec(
        num_scalar_prefetch=1,
        grid=(nb, nk),
        in_specs=[
            pl.BlockSpec((b_tile, 1), lambda i, k, mins: (i, 0)),        # lens
            pl.BlockSpec((b_tile, t_tile), lambda i, k, mins: (i, k)),   # y_pred
            pl.BlockSpec((b_tile, t_tile), lambda i, k, mins: (i, k)),   # y_true
        ],
        out_specs=pl.BlockSpec((b_tile, 1), lambda i, k, mins: (i, 0)),
        scratch_shapes=[pltpu.VMEM((6, b_tile, lane_w), jnp.float32)],
    )

    ccc = pl.pallas_call(
        kernel,
        out_shape=jax.ShapeDtypeStruct((B, 1), jnp.float32),
        grid_spec=grid_spec,
        compiler_params=pltpu.CompilerParams(
            dimension_semantics=("parallel", "arbitrary"),
            vmem_limit_bytes=32 * 1024 * 1024),
        cost_estimate=cost,
    )(tile_min_len, lens2d, y_pred, y_true)

    return (1.0 - jnp.mean(ccc[:, 0])).astype(jnp.float32)


def _ccc_loss_ref(y_pred, y_true, seq_lens=None):
    """Pure-JAX reference mirroring the PyTorch forward exactly."""
    y_pred = jnp.asarray(y_pred, jnp.float32)
    y_true = jnp.asarray(y_true, jnp.float32)
    B, T = y_true.shape
    if seq_lens is None:
        mask = jnp.ones_like(y_true)
    else:
        col = jnp.arange(T)[None, :]
        mask = (col < jnp.asarray(seq_lens)[:, None]).astype(y_true.dtype)
    msum = jnp.sum(mask, axis=1, keepdims=True)
    yt_m = jnp.sum(y_true * mask, axis=1, keepdims=True) / msum
    yp_m = jnp.sum(y_pred * mask, axis=1, keepdims=True) / msum
    yt_v = jnp.sum(mask * (y_true - yt_m) ** 2, axis=1, keepdims=True) / msum
    yp_v = jnp.sum(mask * (y_pred - yp_m) ** 2, axis=1, keepdims=True) / msum
    cov = jnp.sum(mask * (y_true - yt_m) * (y_pred - yp_m), axis=1,
                  keepdims=True) / msum
    ccc = jnp.mean(2.0 * cov / (yt_v + yp_v + (yt_m - yp_m) ** 2), axis=0)
    return 1.0 - ccc[0]


def ccc_loss(y_pred, y_true, seq_lens=None, *, force_pallas=False,
             min_pallas_elems=16384):
    """CCCLoss.forward. Tiny inputs use the fused-XLA reference (the Pallas
    kernel would be pure launch/DMA overhead there); larger inputs stream
    through the Pallas kernel."""
    y_pred = jnp.asarray(y_pred)
    y_true = jnp.asarray(y_true)
    B, T = y_true.shape
    if not force_pallas and B * T < min_pallas_elems:
        return _ccc_loss_ref(y_pred, y_true, seq_lens)
    return _ccc_loss_pallas(y_pred, y_true, seq_lens)


if __name__ == "__main__":
    key = jax.random.PRNGKey(0)
    k1, k2, k3, k4, k5, k6 = jax.random.split(key, 6)

    # Case 1: tiny (B=4, T=16), forced through the kernel -> single block
    # equal to the array (lane_w==1 path), masked and unmasked variants.
    B1, T1 = 4, 16
    yp1 = jax.random.normal(k1, (B1, T1), dtype=jnp.float32)
    yt1 = jax.random.normal(k2, (B1, T1), dtype=jnp.float32)
    sl1 = jnp.array([16, 10, 7, 13], dtype=jnp.int32)

    out1 = ccc_loss(yp1, yt1, sl1, force_pallas=True)
    jax.block_until_ready(out1)
    ref1 = _ccc_loss_ref(yp1, yt1, sl1)
    assert jnp.allclose(out1, ref1, atol=5e-4, rtol=5e-4), (out1, ref1)

    out1b = ccc_loss(yp1, yt1, None, force_pallas=True)
    jax.block_until_ready(out1b)
    ref1b = _ccc_loss_ref(yp1, yt1, None)
    assert jnp.allclose(out1b, ref1b, atol=5e-4, rtol=5e-4), (out1b, ref1b)

    # Case 2: B=6, T=2000 with a small forced t_tile -> multi-step streaming
    # accumulation, ragged last T block (no wrapper padding), and the mix of
    # mask-free fast tiles and masked tiles.
    B2, T2 = 6, 2000
    yp2 = jax.random.normal(k3, (B2, T2), dtype=jnp.float32)
    yt2 = jax.random.normal(k4, (B2, T2), dtype=jnp.float32)
    sl2 = jnp.array([2000, 1500, 777, 1, 1024, 1999], dtype=jnp.int32)

    out2 = _ccc_loss_pallas(yp2, yt2, sl2, max_t_tile=512)
    jax.block_until_ready(out2)
    ref2 = _ccc_loss_ref(yp2, yt2, sl2)
    assert jnp.allclose(out2, ref2, atol=5e-4, rtol=5e-4), (out2, ref2)

    out2b = _ccc_loss_pallas(yp2, yt2, None, max_t_tile=512)
    jax.block_until_ready(out2b)
    ref2b = _ccc_loss_ref(yp2, yt2, None)
    assert jnp.allclose(out2b, ref2b, atol=5e-4, rtol=5e-4), (out2b, ref2b)

    # Case 3: bf16 inputs pass straight through (in-kernel upcast only).
    out3 = _ccc_loss_pallas(yp2.astype(jnp.bfloat16), yt2.astype(jnp.bfloat16),
                            sl2)
    jax.block_until_ready(out3)
    assert jnp.allclose(out3, ref2, atol=2e-2, rtol=2e-2), (out3, ref2)

    # Case 4: batch big enough to split into >= 2 "parallel" batch tiles
    # (feeds both v7x TensorCores), fully aligned mask-free fast path.
    B4, T4 = 32, 1024
    yp4 = jax.random.normal(k5, (B4, T4), dtype=jnp.float32)
    yt4 = jax.random.normal(k6, (B4, T4), dtype=jnp.float32)
    out4 = ccc_loss(yp4, yt4, None, force_pallas=True)
    jax.block_until_ready(out4)
    ref4 = _ccc_loss_ref(yp4, yt4, None)
    assert jnp.allclose(out4, ref4, atol=5e-4, rtol=5e-4), (out4, ref4)

    # Case 5: dispatcher path (tiny input -> fused-XLA reference).
    out5 = ccc_loss(yp1, yt1, sl1)
    jax.block_until_ready(out5)
    assert jnp.allclose(out5, ref1, atol=1e-5, rtol=1e-5), (out5, ref1)

    print("KERNEL_OK")
</pallas_src>

<mosaic_0001>
module attributes {stable_mosaic.version = 11 : i64} {
  func.func @_ccc_kernel(%arg0: i32, %arg1: i32, %arg2: memref<1xi32, #tpu.memory_space<smem>>, %arg3: memref<4x1xi32, #tpu.memory_space<vmem>>, %arg4: memref<4x16xf32, #tpu.memory_space<vmem>>, %arg5: memref<4x16xf32, #tpu.memory_space<vmem>>, %arg6: memref<4x1xf32, #tpu.memory_space<vmem>>, %arg7: memref<6x4x1xf32, #tpu.memory_space<vmem>>) attributes {dimension_semantics = [#tpu.dimension_semantics<parallel>, #tpu.dimension_semantics<arbitrary>], iteration_bounds = array<i64: 1, 1>, scalar_prefetch = 1 : i64, scratch_operands = 1 : i64, tpu.core_type = #tpu.core_type<tc>, window_params = [{transform_indices = @transform_0, window_bounds = array<i64: 4, 1>}, {transform_indices = @transform_1, window_bounds = array<i64: 4, 16>}, {transform_indices = @transform_2, window_bounds = array<i64: 4, 16>}, {transform_indices = @transform_3, window_bounds = array<i64: 4, 1>}]} {
    %c0_i32 = arith.constant 0 : i32
    %0 = arith.cmpi eq, %arg1, %c0_i32 : i32
    %1 = arith.extui %0 : i1 to i32
    %c0_i32_0 = arith.constant 0 : i32
    %2 = arith.cmpi ne, %1, %c0_i32_0 : i32
    scf.if %2 {
      %cst = arith.constant 0.000000e+00 : f32
      %18 = vector.broadcast %cst : f32 to vector<6x4x1xf32>
      %c0_8 = arith.constant 0 : index
      %c0_9 = arith.constant 0 : index
      %c0_10 = arith.constant 0 : index
      %19 = vector.load %arg7[%c0_8, %c0_9, %c0_10] : memref<6x4x1xf32, #tpu.memory_space<vmem>>, vector<6x4x1xf32>
      tpu.vector_store %arg7[%c0_8, %c0_9, %c0_10], %18 {strides = array<i32>} : memref<6x4x1xf32, #tpu.memory_space<vmem>>, vector<6x4x1xf32>,
    } else {
    }
    %c0 = arith.constant 0 : index
    %c0_1 = arith.constant 0 : index
    %3 = vector.load %arg4[%c0, %c0_1] : memref<4x16xf32, #tpu.memory_space<vmem>>, vector<4x16xf32>
    %c0_2 = arith.constant 0 : index
    %c0_3 = arith.constant 0 : index
    %4 = vector.load %arg5[%c0_2, %c0_3] : memref<4x16xf32, #tpu.memory_space<vmem>>, vector<4x16xf32>
    %c1_i32 = arith.constant 1 : i32
    %5 = arith.addi %arg1, %c1_i32 : i32
    %c16_i32 = arith.constant 16 : i32
    %6 = arith.muli %5, %c16_i32 : i32
    %7 = arith.index_cast %arg0 : i32 to index
    %8 = memref.load %arg2[%7] : memref<1xi32, #tpu.memory_space<smem>>
    %9 = arith.cmpi sge, %8, %6 : i32
    %10 = arith.extui %9 : i1 to i32
    %c0_i32_4 = arith.constant 0 : i32
    %11 = arith.cmpi ne, %10, %c0_i32_4 : i32
    scf.if %11 {
      %c0_8 = arith.constant 0 : index
      %c0_9 = arith.constant 0 : index
      %c0_10 = arith.constant 0 : index
      %18 = vector.load %arg7[%c0_8, %c0_9, %c0_10] : memref<6x4x1xf32, #tpu.memory_space<vmem>>, vector<1x4x1xf32>
      %19 = vector.shape_cast %18 : vector<1x4x1xf32> to vector<4x1xf32>
      %cst = arith.constant 1.600000e+01 : f32
      %20 = vector.broadcast %cst : f32 to vector<4x1xf32>
      %21 = arith.addf %19, %20 : vector<4x1xf32>
      %c0_11 = arith.constant 0 : index
      %c0_12 = arith.constant 0 : index
      %c0_13 = arith.constant 0 : index
      %22 = vector.load %arg7[%c0_11, %c0_12, %c0_13] : memref<6x4x1xf32, #tpu.memory_space<vmem>>, vector<1x4x1xf32>
      %23 = vector.shape_cast %22 : vector<1x4x1xf32> to vector<4x1xf32>
      %24 = vector.shape_cast %21 : vector<4x1xf32> to vector<1x4x1xf32>
      tpu.vector_store %arg7[%c0_11, %c0_12, %c0_13], %24 {strides = array<i32>} : memref<6x4x1xf32, #tpu.memory_space<vmem>>, vector<1x4x1xf32>,
      %c1 = arith.constant 1 : index
      %c0_14 = arith.constant 0 : index
      %c0_15 = arith.constant 0 : index
      %25 = vector.load %arg7[%c1, %c0_14, %c0_15] : memref<6x4x1xf32, #tpu.memory_space<vmem>>, vector<1x4x1xf32>
      %26 = vector.shape_cast %25 : vector<1x4x1xf32> to vector<4x1xf32>
      %cst_16 = arith.constant dense<0.000000e+00> : vector<4xf32>
      %27 = vector.multi_reduction <add>, %4, %cst_16 [1] : vector<4x16xf32> to vector<4xf32>
      %28 = vector.shape_cast %27 : vector<4xf32> to vector<4x1xf32>
      %29 = arith.addf %26, %28 : vector<4x1xf32>
      %c1_17 = arith.constant 1 : index
      %c0_18 = arith.constant 0 : index
      %c0_19 = arith.constant 0 : index
      %30 = vector.load %arg7[%c1_17, %c0_18, %c0_19] : memref<6x4x1xf32, #tpu.memory_space<vmem>>, vector<1x4x1xf32>
      %31 = vector.shape_cast %30 : vector<1x4x1xf32> to vector<4x1xf32>
      %32 = vector.shape_cast %29 : vector<4x1xf32> to vector<1x4x1xf32>
      tpu.vector_store %arg7[%c1_17, %c0_18, %c0_19], %32 {strides = array<i32>} : memref<6x4x1xf32, #tpu.memory_space<vmem>>, vector<1x4x1xf32>,
      %c2 = arith.constant 2 : index
      %c0_20 = arith.constant 0 : index
      %c0_21 = arith.constant 0 : index
      %33 = vector.load %arg7[%c2, %c0_20, %c0_21] : memref<6x4x1xf32, #tpu.memory_space<vmem>>, vector<1x4x1xf32>
      %34 = vector.shape_cast %33 : vector<1x4x1xf32> to vector<4x1xf32>
      %cst_22 = arith.constant dense<0.000000e+00> : vector<4xf32>
      %35 = vector.multi_reduction <add>, %3, %cst_22 [1] : vector<4x16xf32> to vector<4xf32>
      %36 = vector.shape_cast %35 : vector<4xf32> to vector<4x1xf32>
      %37 = arith.addf %34, %36 : vector<4x1xf32>
      %c2_23 = arith.constant 2 : index
      %c0_24 = arith.constant 0 : index
      %c0_25 = arith.constant 0 : index
      %38 = vector.load %arg7[%c2_23, %c0_24, %c0_25] : memref<6x4x1xf32, #tpu.memory_space<vmem>>, vector<1x4x1xf32>
      %39 = vector.shape_cast %38 : vector<1x4x1xf32> to vector<4x1xf32>
      %40 = vector.shape_cast %37 : vector<4x1xf32> to vector<1x4x1xf32>
      tpu.vector_store %arg7[%c2_23, %c0_24, %c0_25], %40 {strides = array<i32>} : memref<6x4x1xf32, #tpu.memory_space<vmem>>, vector<1x4x1xf32>,
      %c3 = arith.constant 3 : index
      %c0_26 = arith.constant 0 : index
      %c0_27 = arith.constant 0 : index
      %41 = vector.load %arg7[%c3, %c0_26, %c0_27] : memref<6x4x1xf32, #tpu.memory_space<vmem>>, vector<1x4x1xf32>
      %42 = vector.shape_cast %41 : vector<1x4x1xf32> to vector<4x1xf32>
      %43 = arith.mulf %4, %4 : vector<4x16xf32>
      %cst_28 = arith.constant dense<0.000000e+00> : vector<4xf32>
      %44 = vector.multi_reduction <add>, %43, %cst_28 [1] : vector<4x16xf32> to vector<4xf32>
      %45 = vector.shape_cast %44 : vector<4xf32> to vector<4x1xf32>
      %46 = arith.addf %42, %45 : vector<4x1xf32>
      %c3_29 = arith.constant 3 : index
      %c0_30 = arith.constant 0 : index
      %c0_31 = arith.constant 0 : index
      %47 = vector.load %arg7[%c3_29, %c0_30, %c0_31] : memref<6x4x1xf32, #tpu.memory_space<vmem>>, vector<1x4x1xf32>
      %48 = vector.shape_cast %47 : vector<1x4x1xf32> to vector<4x1xf32>
      %49 = vector.shape_cast %46 : vector<4x1xf32> to vector<1x4x1xf32>
      tpu.vector_store %arg7[%c3_29, %c0_30, %c0_31], %49 {strides = array<i32>} : memref<6x4x1xf32, #tpu.memory_space<vmem>>, vector<1x4x1xf32>,
      %c4 = arith.constant 4 : index
      %c0_32 = arith.constant 0 : index
      %c0_33 = arith.constant 0 : index
      %50 = vector.load %arg7[%c4, %c0_32, %c0_33] : memref<6x4x1xf32, #tpu.memory_space<vmem>>, vector<1x4x1xf32>
      %51 = vector.shape_cast %50 : vector<1x4x1xf32> to vector<4x1xf32>
      %52 = arith.mulf %3, %3 : vector<4x16xf32>
      %cst_34 = arith.constant dense<0.000000e+00> : vector<4xf32>
      %53 = vector.multi_reduction <add>, %52, %cst_34 [1] : vector<4x16xf32> to vector<4xf32>
      %54 = vector.shape_cast %53 : vector<4xf32> to vector<4x1xf32>
      %55 = arith.addf %51, %54 : vector<4x1xf32>
      %c4_35 = arith.constant 4 : index
      %c0_36 = arith.constant 0 : index
      %c0_37 = arith.constant 0 : index
      %56 = vector.load %arg7[%c4_35, %c0_36, %c0_37] : memref<6x4x1xf32, #tpu.memory_space<vmem>>, vector<1x4x1xf32>
      %57 = vector.shape_cast %56 : vector<1x4x1xf32> to vector<4x1xf32>
      %58 = vector.shape_cast %55 : vector<4x1xf32> to vector<1x4x1xf32>
      tpu.vector_store %arg7[%c4_35, %c0_36, %c0_37], %58 {strides = array<i32>} : memref<6x4x1xf32, #tpu.memory_space<vmem>>, vector<1x4x1xf32>,
      %c5 = arith.constant 5 : index
      %c0_38 = arith.constant 0 : index
      %c0_39 = arith.constant 0 : index
      %59 = vector.load %arg7[%c5, %c0_38, %c0_39] : memref<6x4x1xf32, #tpu.memory_space<vmem>>, vector<1x4x1xf32>
      %60 = vector.shape_cast %59 : vector<1x4x1xf32> to vector<4x1xf32>
      %61 = arith.mulf %4, %3 : vector<4x16xf32>
      %cst_40 = arith.constant dense<0.000000e+00> : vector<4xf32>
      %62 = vector.multi_reduction <add>, %61, %cst_40 [1] : vector<4x16xf32> to vector<4xf32>
      %63 = vector.shape_cast %62 : vector<4xf32> to vector<4x1xf32>
      %64 = arith.addf %60, %63 : vector<4x1xf32>
      %c5_41 = arith.constant 5 : index
      %c0_42 = arith.constant 0 : index
      %c0_43 = arith.constant 0 : index
      %65 = vector.load %arg7[%c5_41, %c0_42, %c0_43] : memref<6x4x1xf32, #tpu.memory_space<vmem>>, vector<1x4x1xf32>
      %66 = vector.shape_cast %65 : vector<1x4x1xf32> to vector<4x1xf32>
      %67 = vector.shape_cast %64 : vector<4x1xf32> to vector<1x4x1xf32>
      tpu.vector_store %arg7[%c5_41, %c0_42, %c0_43], %67 {strides = array<i32>} : memref<6x4x1xf32, #tpu.memory_space<vmem>>, vector<1x4x1xf32>,
    } else {
    }
    %true = arith.constant true
    %12 = arith.xori %9, %true : i1
    %13 = arith.extui %12 : i1 to i32
    %c0_i32_5 = arith.constant 0 : i32
    %14 = arith.cmpi ne, %13, %c0_i32_5 : i32
    scf.if %14 {
      %18 = tpu.iota {dimensions = array<i32: 1>} : vector<4x16xi32>
      %c16_i32_8 = arith.constant 16 : i32
      %19 = arith.muli %arg1, %c16_i32_8 : i32
      %20 = vector.broadcast %19 : i32 to vector<4x16xi32>
      %21 = arith.addi %18, %20 : vector<4x16xi32>
      %c0_9 = arith.constant 0 : index
      %c0_10 = arith.constant 0 : index
      %22 = vector.load %arg3[%c0_9, %c0_10] : memref<4x1xi32, #tpu.memory_space<vmem>>, vector<4x1xi32>
      %23 = vector.broadcast %22 : vector<4x1xi32> to vector<4x16xi32>
      %24 = arith.cmpi slt, %21, %23 : vector<4x16xi32>
      %cst = arith.constant 0.000000e+00 : f32
      %25 = vector.broadcast %cst : f32 to vector<4x16xf32>
      %26 = arith.select %24, %4, %25 : vector<4x16xi1>, vector<4x16xf32>
      %cst_11 = arith.constant 0.000000e+00 : f32
      %27 = vector.broadcast %cst_11 : f32 to vector<4x16xf32>
      %28 = arith.select %24, %3, %27 : vector<4x16xi1>, vector<4x16xf32>
      %29 = arith.extui %24 : vector<4x16xi1> to vector<4x16xi32>
      %30 = arith.sitofp %29 : vector<4x16xi32> to vector<4x16xf32>
      %cst_12 = arith.constant dense<0.000000e+00> : vector<4xf32>
      %31 = vector.multi_reduction <add>, %30, %cst_12 [1] : vector<4x16xf32> to vector<4xf32>
      %32 = vector.shape_cast %31 : vector<4xf32> to vector<4x1xf32>
      %c0_13 = arith.constant 0 : index
      %c0_14 = arith.constant 0 : index
      %c0_15 = arith.constant 0 : index
      %33 = vector.load %arg7[%c0_13, %c0_14, %c0_15] : memref<6x4x1xf32, #tpu.memory_space<vmem>>, vector<1x4x1xf32>
      %34 = vector.shape_cast %33 : vector<1x4x1xf32> to vector<4x1xf32>
      %35 = arith.addf %34, %32 : vector<4x1xf32>
      %c0_16 = arith.constant 0 : index
      %c0_17 = arith.constant 0 : index
      %c0_18 = arith.constant 0 : index
      %36 = vector.load %arg7[%c0_16, %c0_17, %c0_18] : memref<6x4x1xf32, #tpu.memory_space<vmem>>, vector<1x4x1xf32>
      %37 = vector.shape_cast %36 : vector<1x4x1xf32> to vector<4x1xf32>
      %38 = vector.shape_cast %35 : vector<4x1xf32> to vector<1x4x1xf32>
      tpu.vector_store %arg7[%c0_16, %c0_17, %c0_18], %38 {strides = array<i32>} : memref<6x4x1xf32, #tpu.memory_space<vmem>>, vector<1x4x1xf32>,
      %c1 = arith.constant 1 : index
      %c0_19 = arith.constant 0 : index
      %c0_20 = arith.constant 0 : index
      %39 = vector.load %arg7[%c1, %c0_19, %c0_20] : memref<6x4x1xf32, #tpu.memory_space<vmem>>, vector<1x4x1xf32>
      %40 = vector.shape_cast %39 : vector<1x4x1xf32> to vector<4x1xf32>
      %cst_21 = arith.constant dense<0.000000e+00> : vector<4xf32>
      %41 = vector.multi_reduction <add>, %26, %cst_21 [1] : vector<4x16xf32> to vector<4xf32>
      %42 = vector.shape_cast %41 : vector<4xf32> to vector<4x1xf32>
      %43 = arith.addf %40, %42 : vector<4x1xf32>
      %c1_22 = arith.constant 1 : index
      %c0_23 = arith.constant 0 : index
      %c0_24 = arith.constant 0 : index
      %44 = vector.load %arg7[%c1_22, %c0_23, %c0_24] : memref<6x4x1xf32, #tpu.memory_space<vmem>>, vector<1x4x1xf32>
      %45 = vector.shape_cast %44 : vector<1x4x1xf32> to vector<4x1xf32>
      %46 = vector.shape_cast %43 : vector<4x1xf32> to vector<1x4x1xf32>
      tpu.vector_store %arg7[%c1_22, %c0_23, %c0_24], %46 {strides = array<i32>} : memref<6x4x1xf32, #tpu.memory_space<vmem>>, vector<1x4x1xf32>,
      %c2 = arith.constant 2 : index
      %c0_25 = arith.constant 0 : index
      %c0_26 = arith.constant 0 : index
      %47 = vector.load %arg7[%c2, %c0_25, %c0_26] : memref<6x4x1xf32, #tpu.memory_space<vmem>>, vector<1x4x1xf32>
      %48 = vector.shape_cast %47 : vector<1x4x1xf32> to vector<4x1xf32>
      %cst_27 = arith.constant dense<0.000000e+00> : vector<4xf32>
      %49 = vector.multi_reduction <add>, %28, %cst_27 [1] : vector<4x16xf32> to vector<4xf32>
      %50 = vector.shape_cast %49 : vector<4xf32> to vector<4x1xf32>
      %51 = arith.addf %48, %50 : vector<4x1xf32>
      %c2_28 = arith.constant 2 : index
      %c0_29 = arith.constant 0 : index
      %c0_30 = arith.constant 0 : index
      %52 = vector.load %arg7[%c2_28, %c0_29, %c0_30] : memref<6x4x1xf32, #tpu.memory_space<vmem>>, vector<1x4x1xf32>
      %53 = vector.shape_cast %52 : vector<1x4x1xf32> to vector<4x1xf32>
      %54 = vector.shape_cast %51 : vector<4x1xf32> to vector<1x4x1xf32>
      tpu.vector_store %arg7[%c2_28, %c0_29, %c0_30], %54 {strides = array<i32>} : memref<6x4x1xf32, #tpu.memory_space<vmem>>, vector<1x4x1xf32>,
      %c3 = arith.constant 3 : index
      %c0_31 = arith.constant 0 : index
      %c0_32 = arith.constant 0 : index
      %55 = vector.load %arg7[%c3, %c0_31, %c0_32] : memref<6x4x1xf32, #tpu.memory_space<vmem>>, vector<1x4x1xf32>
      %56 = vector.shape_cast %55 : vector<1x4x1xf32> to vector<4x1xf32>
      %57 = arith.mulf %26, %26 : vector<4x16xf32>
      %cst_33 = arith.constant dense<0.000000e+00> : vector<4xf32>
      %58 = vector.multi_reduction <add>, %57, %cst_33 [1] : vector<4x16xf32> to vector<4xf32>
      %59 = vector.shape_cast %58 : vector<4xf32> to vector<4x1xf32>
      %60 = arith.addf %56, %59 : vector<4x1xf32>
      %c3_34 = arith.constant 3 : index
      %c0_35 = arith.constant 0 : index
      %c0_36 = arith.constant 0 : index
      %61 = vector.load %arg7[%c3_34, %c0_35, %c0_36] : memref<6x4x1xf32, #tpu.memory_space<vmem>>, vector<1x4x1xf32>
      %62 = vector.shape_cast %61 : vector<1x4x1xf32> to vector<4x1xf32>
      %63 = vector.shape_cast %60 : vector<4x1xf32> to vector<1x4x1xf32>
      tpu.vector_store %arg7[%c3_34, %c0_35, %c0_36], %63 {strides = array<i32>} : memref<6x4x1xf32, #tpu.memory_space<vmem>>, vector<1x4x1xf32>,
      %c4 = arith.constant 4 : index
      %c0_37 = arith.constant 0 : index
      %c0_38 = arith.constant 0 : index
      %64 = vector.load %arg7[%c4, %c0_37, %c0_38] : memref<6x4x1xf32, #tpu.memory_space<vmem>>, vector<1x4x1xf32>
      %65 = vector.shape_cast %64 : vector<1x4x1xf32> to vector<4x1xf32>
      %66 = arith.mulf %28, %28 : vector<4x16xf32>
      %cst_39 = arith.constant dense<0.000000e+00> : vector<4xf32>
      %67 = vector.multi_reduction <add>, %66, %cst_39 [1] : vector<4x16xf32> to vector<4xf32>
      %68 = vector.shape_cast %67 : vector<4xf32> to vector<4x1xf32>
      %69 = arith.addf %65, %68 : vector<4x1xf32>
      %c4_40 = arith.constant 4 : index
      %c0_41 = arith.constant 0 : index
      %c0_42 = arith.constant 0 : index
      %70 = vector.load %arg7[%c4_40, %c0_41, %c0_42] : memref<6x4x1xf32, #tpu.memory_space<vmem>>, vector<1x4x1xf32>
      %71 = vector.shape_cast %70 : vector<1x4x1xf32> to vector<4x1xf32>
      %72 = vector.shape_cast %69 : vector<4x1xf32> to vector<1x4x1xf32>
      tpu.vector_store %arg7[%c4_40, %c0_41, %c0_42], %72 {strides = array<i32>} : memref<6x4x1xf32, #tpu.memory_space<vmem>>, vector<1x4x1xf32>,
      %c5 = arith.constant 5 : index
      %c0_43 = arith.constant 0 : index
      %c0_44 = arith.constant 0 : index
      %73 = vector.load %arg7[%c5, %c0_43, %c0_44] : memref<6x4x1xf32, #tpu.memory_space<vmem>>, vector<1x4x1xf32>
      %74 = vector.shape_cast %73 : vector<1x4x1xf32> to vector<4x1xf32>
      %75 = arith.mulf %26, %28 : vector<4x16xf32>
      %cst_45 = arith.constant dense<0.000000e+00> : vector<4xf32>
      %76 = vector.multi_reduction <add>, %75, %cst_45 [1] : vector<4x16xf32> to vector<4xf32>
      %77 = vector.shape_cast %76 : vector<4xf32> to vector<4x1xf32>
      %78 = arith.addf %74, %77 : vector<4x1xf32>
      %c5_46 = arith.constant 5 : index
      %c0_47 = arith.constant 0 : index
      %c0_48 = arith.constant 0 : index
      %79 = vector.load %arg7[%c5_46, %c0_47, %c0_48] : memref<6x4x1xf32, #tpu.memory_space<vmem>>, vector<1x4x1xf32>
      %80 = vector.shape_cast %79 : vector<1x4x1xf32> to vector<4x1xf32>
      %81 = vector.shape_cast %78 : vector<4x1xf32> to vector<1x4x1xf32>
      tpu.vector_store %arg7[%c5_46, %c0_47, %c0_48], %81 {strides = array<i32>} : memref<6x4x1xf32, #tpu.memory_space<vmem>>, vector<1x4x1xf32>,
    } else {
    }
    %c0_i32_6 = arith.constant 0 : i32
    %15 = arith.cmpi eq, %arg1, %c0_i32_6 : i32
    %16 = arith.extui %15 : i1 to i32
    %c0_i32_7 = arith.constant 0 : i32
    %17 = arith.cmpi ne, %16, %c0_i32_7 : i32
    scf.if %17 {
      %c0_8 = arith.constant 0 : index
      %c0_9 = arith.constant 0 : index
      %c0_10 = arith.constant 0 : index
      %18 = vector.load %arg7[%c0_8, %c0_9, %c0_10] : memref<6x4x1xf32, #tpu.memory_space<vmem>>, vector<1x4x1xf32>
      %19 = vector.shape_cast %18 : vector<1x4x1xf32> to vector<4x1xf32>
      %cst = arith.constant dense<0.000000e+00> : vector<4xf32>
      %20 = vector.multi_reduction <add>, %19, %cst [1] : vector<4x1xf32> to vector<4xf32>
      %21 = vector.shape_cast %20 : vector<4xf32> to vector<4x1xf32>
      %c1 = arith.constant 1 : index
      %c0_11 = arith.constant 0 : index
      %c0_12 = arith.constant 0 : index
      %22 = vector.load %arg7[%c1, %c0_11, %c0_12] : memref<6x4x1xf32, #tpu.memory_space<vmem>>, vector<1x4x1xf32>
      %23 = vector.shape_cast %22 : vector<1x4x1xf32> to vector<4x1xf32>
      %cst_13 = arith.constant dense<0.000000e+00> : vector<4xf32>
      %24 = vector.multi_reduction <add>, %23, %cst_13 [1] : vector<4x1xf32> to vector<4xf32>
      %25 = vector.shape_cast %24 : vector<4xf32> to vector<4x1xf32>
      %c2 = arith.constant 2 : index
      %c0_14 = arith.constant 0 : index
      %c0_15 = arith.constant 0 : index
      %26 = vector.load %arg7[%c2, %c0_14, %c0_15] : memref<6x4x1xf32, #tpu.memory_space<vmem>>, vector<1x4x1xf32>
      %27 = vector.shape_cast %26 : vector<1x4x1xf32> to vector<4x1xf32>
      %cst_16 = arith.constant dense<0.000000e+00> : vector<4xf32>
      %28 = vector.multi_reduction <add>, %27, %cst_16 [1] : vector<4x1xf32> to vector<4xf32>
      %29 = vector.shape_cast %28 : vector<4xf32> to vector<4x1xf32>
      %c3 = arith.constant 3 : index
      %c0_17 = arith.constant 0 : index
      %c0_18 = arith.constant 0 : index
      %30 = vector.load %arg7[%c3, %c0_17, %c0_18] : memref<6x4x1xf32, #tpu.memory_space<vmem>>, vector<1x4x1xf32>
      %31 = vector.shape_cast %30 : vector<1x4x1xf32> to vector<4x1xf32>
      %cst_19 = arith.constant dense<0.000000e+00> : vector<4xf32>
      %32 = vector.multi_reduction <add>, %31, %cst_19 [1] : vector<4x1xf32> to vector<4xf32>
      %33 = vector.shape_cast %32 : vector<4xf32> to vector<4x1xf32>
      %c4 = arith.constant 4 : index
      %c0_20 = arith.constant 0 : index
      %c0_21 = arith.constant 0 : index
      %34 = vector.load %arg7[%c4, %c0_20, %c0_21] : memref<6x4x1xf32, #tpu.memory_space<vmem>>, vector<1x4x1xf32>
      %35 = vector.shape_cast %34 : vector<1x4x1xf32> to vector<4x1xf32>
      %cst_22 = arith.constant dense<0.000000e+00> : vector<4xf32>
      %36 = vector.multi_reduction <add>, %35, %cst_22 [1] : vector<4x1xf32> to vector<4xf32>
      %37 = vector.shape_cast %36 : vector<4xf32> to vector<4x1xf32>
      %c5 = arith.constant 5 : index
      %c0_23 = arith.constant 0 : index
      %c0_24 = arith.constant 0 : index
      %38 = vector.load %arg7[%c5, %c0_23, %c0_24] : memref<6x4x1xf32, #tpu.memory_space<vmem>>, vector<1x4x1xf32>
      %39 = vector.shape_cast %38 : vector<1x4x1xf32> to vector<4x1xf32>
      %cst_25 = arith.constant dense<0.000000e+00> : vector<4xf32>
      %40 = vector.multi_reduction <add>, %39, %cst_25 [1] : vector<4x1xf32> to vector<4xf32>
      %41 = vector.shape_cast %40 : vector<4xf32> to vector<4x1xf32>
      %cst_26 = arith.constant 1.000000e+00 : f32
      %42 = vector.broadcast %cst_26 : f32 to vector<4x1xf32>
      %43 = arith.divf %42, %21 : vector<4x1xf32>
      %44 = arith.mulf %25, %43 : vector<4x1xf32>
      %45 = arith.mulf %29, %43 : vector<4x1xf32>
      %46 = arith.mulf %33, %43 : vector<4x1xf32>
      %47 = arith.mulf %44, %44 : vector<4x1xf32>
      %48 = arith.subf %46, %47 : vector<4x1xf32>
      %49 = arith.mulf %37, %43 : vector<4x1xf32>
      %50 = arith.mulf %45, %45 : vector<4x1xf32>
      %51 = arith.subf %49, %50 : vector<4x1xf32>
      %52 = arith.mulf %41, %43 : vector<4x1xf32>
      %53 = arith.mulf %44, %45 : vector<4x1xf32>
      %54 = arith.subf %52, %53 : vector<4x1xf32>
      %55 = arith.subf %44, %45 : vector<4x1xf32>
      %cst_27 = arith.constant 2.000000e+00 : f32
      %56 = vector.broadcast %cst_27 : f32 to vector<4x1xf32>
      %57 = arith.mulf %56, %54 : vector<4x1xf32>
      %58 = arith.addf %48, %51 : vector<4x1xf32>
      %59 = arith.mulf %55, %55 : vector<4x1xf32>
      %60 = arith.addf %58, %59 : vector<4x1xf32>
      %61 = arith.divf %57, %60 : vector<4x1xf32>
      %c0_28 = arith.constant 0 : index
      %c0_29 = arith.constant 0 : index
      %62 = vector.load %arg6[%c0_28, %c0_29] : memref<4x1xf32, #tpu.memory_space<vmem>>, vector<4x1xf32>
      tpu.vector_store %arg6[%c0_28, %c0_29], %61 {strides = array<i32>} : memref<4x1xf32, #tpu.memory_space<vmem>>, vector<4x1xf32>,
    } else {
    }
    return
  }
  func.func @transform_0(%arg0: i32, %arg1: i32, %arg2: memref<1xi32, #tpu.memory_space<smem>>) -> (i32, i32) {
    %c0_i32 = arith.constant 0 : i32
    %c0_i32_0 = arith.constant 0 : i32
    return %arg0, %c0_i32 : i32, i32
  }
  func.func @transform_1(%arg0: i32, %arg1: i32, %arg2: memref<1xi32, #tpu.memory_space<smem>>) -> (i32, i32) {
    %c0_i32 = arith.constant 0 : i32
    return %arg0, %arg1 : i32, i32
  }
  func.func @transform_2(%arg0: i32, %arg1: i32, %arg2: memref<1xi32, #tpu.memory_space<smem>>) -> (i32, i32) {
    %c0_i32 = arith.constant 0 : i32
    return %arg0, %arg1 : i32, i32
  }
  func.func @transform_3(%arg0: i32, %arg1: i32, %arg2: memref<1xi32, #tpu.memory_space<smem>>) -> (i32, i32) {
    %c0_i32 = arith.constant 0 : i32
    %c0_i32_0 = arith.constant 0 : i32
    return %arg0, %c0_i32 : i32, i32
  }
}

</mosaic_0001>

<llo_original>
// kernel: tpu_custom_call.1
$region0: #{tpu_custom_call.1}
  #allocation0 [shape = 'u32[]', space=smem, size = 0x4, offset = 0x4, fixed_abs, tag = 'smem constant byte address 0x4 - core index']
  #allocation1 [shape = 'u32[144,128]{1,0:T(1,128)}', space=vmem, size = 0x12000, scoped, tag = 'internal scratch']
  #allocation2 [shape = 'f32[6,4,1]{2,1,0:T(4,128)}', space=vmem, size = 0x3000, scoped, tag = 'scratch operand']
  #allocation3 [shape = 's32[1]{0}', space=sflag, size = 0x4, scoped, tag = 'scoped memory for tpu_custom_call.1']
  #allocation4 [shape = 's32[1]{0:T(128)S(6)}', space=smem, size = 0x200, scoped, tag = 'prefetched SMEM operand 0']
  %s0 = inlined_call_operand.<no memory space> [shape: s32[1], index: 0, kind: input, shape index: {}]
  %s1 = inlined_call_operand.vmem [shape: s32[4,1], index: 1, kind: input, shape index: {}]
  %s2 = inlined_call_operand.vmem [shape: f32[4,16], index: 2, kind: input, shape index: {}]
  %s3 = inlined_call_operand.vmem [shape: f32[4,16], index: 3, kind: input, shape index: {}]
  %s4 = inlined_call_operand.vmem [shape: f32[4,1], index: 4, kind: output, shape index: {}]
  %s5 = sld [smem:[#allocation0]]
  $region38: #{tpu_custom_call.1} parent=0
    _
  %s7 = ssub.s32 1, %s5
  %s8 = scalar_select 0, %s7, %s5
  %9 = sst [smem:[#allocation4]] %s0
  // Predicated region
  $region2: #{tpu_custom_call.1} parent=0 // pred_check
    _
  $region3: #{tpu_custom_call.1} parent=0 // pred_check_branch
    %11 = sbr.rel (0) target = $region5
  $region4: #{tpu_custom_call.1} parent=0 // pred_region
    _
  $region5: #{tpu_custom_call.1} parent=0 // pred_fallthru
    _
  // Predicated region
  $region6: #{tpu_custom_call.1} parent=0 // pred_check
    _
  $region7: #{tpu_custom_call.1} parent=0 // pred_check_branch
    %13 = sbr.rel (0) target = $region9
  $region8: #{tpu_custom_call.1} parent=0 // pred_region
    _
  $region9: #{tpu_custom_call.1} parent=0 // pred_fallthru
    _
  // Predicated region
  $region10: #{tpu_custom_call.1} parent=0 // pred_check
    _
  $region11: #{tpu_custom_call.1} parent=0 // pred_check_branch
    %15 = sbr.rel (0) target = $region13
  $region12: #{tpu_custom_call.1} parent=0 // pred_region
    _
  $region13: #{tpu_custom_call.1} parent=0 // pred_fallthru
    _
  %p16 = scmp.eq.s32.totalorder 0, 0
  // Predicated region
  $region14: #{tpu_custom_call.1} parent=0 // pred_check
    %p17 = pneg %p16
  $region15: #{tpu_custom_call.1} parent=0 // pred_check_branch
    %19 = sbr.rel (%p17) target = $region17
  $region16: #{tpu_custom_call.1} parent=0 // pred_region
    %vm20 = vcmask 3072
    %21 = vst.msk [vmem:[#allocation2] sm:$0xf] %vm20, 0.0
    %22 = vst.msk [vmem:[#allocation2 + $0x4] sm:$0xf] %vm20, 0.0
    %23 = vst.msk [vmem:[#allocation2 + $0x8] sm:$0xf] %vm20, 0.0
    %24 = vst.msk [vmem:[#allocation2 + $0xc] sm:$0xf] %vm20, 0.0
    %25 = vst.msk [vmem:[#allocation2 + $0x10] sm:$0xf] %vm20, 0.0
    %26 = vst.msk [vmem:[#allocation2 + $0x14] sm:$0xf] %vm20, 0.0
  $region17: #{tpu_custom_call.1} parent=0 // pred_fallthru
    _
  %v27 = vld [vmem:[%s2] sm:$0xf]
  %v28 = vld [vmem:[%s3] sm:$0xf]
  %s29 = sadd.s32 0, 1
  %s30 = smul.u32 %s29, 16
  %s31 = sld [smem:[#allocation4]]
  %p32 = scmp.ge.s32.totalorder %s31, %s30
  // Predicated region
  $region18: #{tpu_custom_call.1} parent=0 // pred_check
    %p33 = pneg %p32
  $region19: #{tpu_custom_call.1} parent=0 // pred_check_branch
    %35 = sbr.rel (%p33) target = $region21
  $region20: #{tpu_custom_call.1} parent=0 // pred_region
    %v36 = vld [vmem:[#allocation2] sm:$0xf]
    %v37 = vadd.f32 %v36, 16.0
    %vm38 = vcmask 3072
    %39 = vst.msk [vmem:[#allocation2] sm:$0xf] %vm38, %v37
    %s40 = scalar_lea.vmem [#allocation2], 4
    %v41 = vld [vmem:[%s40] sm:$0xf]
    %vm42 = vcmask 125952
    %v43 = vsel %vm42, %v28, 0.0
    %44 = vadd.xlane.f32.xlu0 %v43
    %v45 = vpop.xlane.xlu0 %44
    %v46 = vadd.f32 %v41, %v45
    %47 = vst.msk [vmem:[%s40] sm:$0xf] %vm38, %v46
    %s48 = scalar_lea.vmem [#allocation2], 8
    %v49 = vld [vmem:[%s48] sm:$0xf]
    %v50 = vsel %vm42, %v27, 0.0
    %51 = vadd.xlane.f32.xlu0 %v50
    %v52 = vpop.xlane.xlu0 %51
    %v53 = vadd.f32 %v49, %v52
    %54 = vst.msk [vmem:[%s48] sm:$0xf] %vm38, %v53
    %s55 = scalar_lea.vmem [#allocation2], 12
    %v56 = vld [vmem:[%s55] sm:$0xf]
    %v57 = vmul.f32 %v28, %v28
    %v58 = vsel %vm42, %v57, 0.0
    %59 = vadd.xlane.f32.xlu0 %v58
    %v60 = vpop.xlane.xlu0 %59
    %v61 = vadd.f32 %v56, %v60
    %62 = vst.msk [vmem:[%s55] sm:$0xf] %vm38, %v61
    %s63 = scalar_lea.vmem [#allocation2], 16
    %v64 = vld [vmem:[%s63] sm:$0xf]
    %v65 = vmul.f32 %v27, %v27
    %v66 = vsel %vm42, %v65, 0.0
    %67 = vadd.xlane.f32.xlu0 %v66
    %v68 = vpop.xlane.xlu0 %67
    %v69 = vadd.f32 %v64, %v68
    %70 = vst.msk [vmem:[%s63] sm:$0xf] %vm38, %v69
    %s71 = scalar_lea.vmem [#allocation2], 20
    %v72 = vld [vmem:[%s71] sm:$0xf]
    %v73 = vmul.f32 %v28, %v27
    %v74 = vsel %vm42, %v73, 0.0
    %75 = vadd.xlane.f32.xlu0 %v74
    %v76 = vpop.xlane.xlu0 %75
    %v77 = vadd.f32 %v72, %v76
    %78 = vst.msk [vmem:[%s71] sm:$0xf] %vm38, %v77
  $region21: #{tpu_custom_call.1} parent=0 // pred_fallthru
    _
  %p79 = scmp.lt.s32.totalorder %s31, %s30
  // Predicated region
  $region22: #{tpu_custom_call.1} parent=0 // pred_check
    %p80 = pneg %p79
  $region23: #{tpu_custom_call.1} parent=0 // pred_check_branch
    %82 = sbr.rel (%p80) target = $region25
  $region24: #{tpu_custom_call.1} parent=0 // pred_region
    %v83 = vlaneseq
    %v84 = vand.u32 %v83, 127
    %s85 = smul.u32 0, 16
    %v86 = vstv %s85
    %v87 = vadd.s32 %v84, %v86
    %v88 = vld [vmem:[%s1] sm:$0xf]
    %89 = vset.pattern.permute.xlu0 0
    %90 = vperm.xlu0 %89, %v88
    %v91 = vpop.permute.xlu0 %90
    %vm92 = vcmp.lt.s32.totalorder %v87, %v91
    %v93 = vsel %vm92, %v28, 0.0
    %v94 = vsel %vm92, %v27, 0.0
    %v95 = vsel %vm92, 1, 0
    %v96 = vcvt.s32.f32 %v95
    %vm97 = vcmask 125952
    %v98 = vsel %vm97, %v96, 0.0
    %99 = vadd.xlane.f32.xlu0 %v98
    %v100 = vpop.xlane.xlu0 %99
    %v101 = vld [vmem:[#allocation2] sm:$0xf]
    %v102 = vadd.f32 %v101, %v100
    %vm103 = vcmask 3072
    %104 = vst.msk [vmem:[#allocation2] sm:$0xf] %vm103, %v102
    %s105 = scalar_lea.vmem [#allocation2], 4
    %v106 = vld [vmem:[%s105] sm:$0xf]
    %v107 = vsel %vm97, %v93, 0.0
    %108 = vadd.xlane.f32.xlu0 %v107
    %v109 = vpop.xlane.xlu0 %108
    %v110 = vadd.f32 %v106, %v109
    %111 = vst.msk [vmem:[%s105] sm:$0xf] %vm103, %v110
    %s112 = scalar_lea.vmem [#allocation2], 8
    %v113 = vld [vmem:[%s112] sm:$0xf]
    %v114 = vsel %vm97, %v94, 0.0
    %115 = vadd.xlane.f32.xlu0 %v114
    %v116 = vpop.xlane.xlu0 %115
    %v117 = vadd.f32 %v113, %v116
    %118 = vst.msk [vmem:[%s112] sm:$0xf] %vm103, %v117
    %s119 = scalar_lea.vmem [#allocation2], 12
    %v120 = vld [vmem:[%s119] sm:$0xf]
    %v121 = vmul.f32 %v93, %v93
    %v122 = vsel %vm97, %v121, 0.0
    %123 = vadd.xlane.f32.xlu0 %v122
    %v124 = vpop.xlane.xlu0 %123
    %v125 = vadd.f32 %v120, %v124
    %126 = vst.msk [vmem:[%s119] sm:$0xf] %vm103, %v125
    %s127 = scalar_lea.vmem [#allocation2], 16
    %v128 = vld [vmem:[%s127] sm:$0xf]
    %v129 = vmul.f32 %v94, %v94
    %v130 = vsel %vm97, %v129, 0.0
    %131 = vadd.xlane.f32.xlu0 %v130
    %v132 = vpop.xlane.xlu0 %131
    %v133 = vadd.f32 %v128, %v132
    %134 = vst.msk [vmem:[%s127] sm:$0xf] %vm103, %v133
    %s135 = scalar_lea.vmem [#allocation2], 20
    %v136 = vld [vmem:[%s135] sm:$0xf]
    %v137 = vmul.f32 %v93, %v94
    %v138 = vsel %vm97, %v137, 0.0
    %139 = vadd.xlane.f32.xlu0 %v138
    %v140 = vpop.xlane.xlu0 %139
    %v141 = vadd.f32 %v136, %v140
    %142 = vst.msk [vmem:[%s135] sm:$0xf] %vm103, %v141
  $region25: #{tpu_custom_call.1} parent=0 // pred_fallthru
    _
  // Predicated region
  $region26: #{tpu_custom_call.1} parent=0 // pred_check
    %p143 = pneg %p16
  $region27: #{tpu_custom_call.1} parent=0 // pred_check_branch
    %145 = sbr.rel (%p143) target = $region29
  $region28: #{tpu_custom_call.1} parent=0 // pred_region
    %v146 = vld [vmem:[#allocation2] sm:$0xf]
    %v147 = vadd.f32 %v146, 0.0
    %s148 = scalar_lea.vmem [#allocation2], 4
    %v149 = vld [vmem:[%s148] sm:$0xf]
    %v150 = vadd.f32 %v149, 0.0
    %s151 = scalar_lea.vmem [#allocation2], 8
    %v152 = vld [vmem:[%s151] sm:$0xf]
    %v153 = vadd.f32 %v152, 0.0
    %s154 = scalar_lea.vmem [#allocation2], 12
    %v155 = vld [vmem:[%s154] sm:$0xf]
    %v156 = vadd.f32 %v155, 0.0
    %s157 = scalar_lea.vmem [#allocation2], 16
    %v158 = vld [vmem:[%s157] sm:$0xf]
    %v159 = vadd.f32 %v158, 0.0
    %s160 = scalar_lea.vmem [#allocation2], 20
    %v161 = vld [vmem:[%s160] sm:$0xf]
    %v162 = vadd.f32 %v161, 0.0
    %v163 = vrcp.pop %v147
    %v164 = vmul.f32 1.0, %v163
    %v165 = vmul.f32 %v150, %v164
    %v166 = vmul.f32 %v153, %v164
    %v167 = vmul.f32 %v156, %v164
    %v168 = vmul.f32 %v165, %v165
    %v169 = vsub.f32 %v167, %v168
    %v170 = vmul.f32 %v159, %v164
    %v171 = vmul.f32 %v166, %v166
    %v172 = vsub.f32 %v170, %v171
    %v173 = vmul.f32 %v162, %v164
    %v174 = vmul.f32 %v165, %v166
    %v175 = vsub.f32 %v173, %v174
    %v176 = vsub.f32 %v165, %v166
    %v177 = vmul.f32 %v175, 2.0
    %v178 = vadd.f32 %v169, %v172
    %v179 = vmul.f32 %v176, %v176
    %v180 = vadd.f32 %v178, %v179
    %v181 = vrcp.pop %v180
    %v182 = vmul.f32 %v177, %v181
    %vm183 = vcmask 3072
    %184 = vst.msk [vmem:[%s4] sm:$0xf] %vm183, %v182
  $region29: #{tpu_custom_call.1} parent=0 // pred_fallthru
    _
  // Predicated region
  $region30: #{tpu_custom_call.1} parent=0 // pred_check
    _
  $region31: #{tpu_custom_call.1} parent=0 // pred_check_branch
    %186 = sbr.rel (0) target = $region33
  $region32: #{tpu_custom_call.1} parent=0 // pred_region
    _
  $region33: #{tpu_custom_call.1} parent=0 // pred_fallthru
    _
  // Predicated region
  $region34: #{tpu_custom_call.1} parent=0 // pred_check
    _
  $region35: #{tpu_custom_call.1} parent=0 // pred_check_branch
    %188 = sbr.rel (0) target = $region37
  $region36: #{tpu_custom_call.1} parent=0 // pred_region
    _
  $region37: #{tpu_custom_call.1} parent=0 // pred_fallthru
    _

</llo_original>
